<compile_context>
chip_gen: v7x
topology: tpu7x:2x2x1
jax: 0.10.0
libtpu: 0.0.40
codegen_flags: <defaults>
</compile_context>

<pallas_src>
import functools

import jax
import jax.numpy as jnp
from jax import lax
from jax.experimental import pallas as pl
from jax.experimental.pallas import tpu as pltpu

EPS = 1e-10
PACK = 8  # rows packed together along the lane axis


def _round_up(a, b):
    return ((a + b - 1) // b) * b


# ---------------------------------------------------------------------------
# Per-16-lane-segment argmax one-hot on packed rows (pure jnp/lax: safe both
# under Mosaic and under interpret mode).
# ---------------------------------------------------------------------------
def _seg_reduce_bcast(x, seg, reducer):
    """Reduce each contiguous `seg`-lane segment, broadcast back to full width."""
    rows = x.shape[0]
    n_seg = x.shape[-1] // seg
    pieces = []
    for g in range(n_seg):
        r = reducer(x[:, g * seg:(g + 1) * seg], axis=-1, keepdims=True)
        pieces.append(jnp.broadcast_to(r, (rows, seg)))
    return jnp.concatenate(pieces, axis=-1)


def _segmented_argmax_onehot(scores, seg, first_only):
    """One-hot (f32) of the per-segment max.

    first_only=True  -> first index attaining the max (torch.max semantics,
                        deterministic testing path).
    first_only=False -> plain `scores == segment_max` (training path: Gumbel
                        noise makes ties measure-zero, so the extra cross-lane
                        min-reduce is skipped).
    """
    seg_max = _seg_reduce_bcast(scores, seg, jnp.max)
    is_max = scores == seg_max
    if not first_only:
        return is_max.astype(jnp.float32)
    col = lax.broadcasted_iota(jnp.int32, scores.shape, 1) % seg
    cand = jnp.where(is_max, col, seg)
    seg_ind = _seg_reduce_bcast(cand, seg, jnp.min)
    return (col == seg_ind).astype(jnp.float32)


# ---------------------------------------------------------------------------
# Kernels
# ---------------------------------------------------------------------------
def _vq_test_kernel(x_ref, wl_ref, bl_ref, cb_ref, logits_ref, codes_ref, *, seg):
    """testing=True: plain per-row argmax over the logits (packed layout)."""
    logits = (jnp.dot(x_ref[...], wl_ref[...], preferred_element_type=jnp.float32)
              + bl_ref[...])
    logits_ref[...] = logits.astype(logits_ref.dtype)
    onehot = _segmented_argmax_onehot(logits, seg, first_only=True)
    codes_ref[...] = jnp.dot(onehot.astype(cb_ref.dtype), cb_ref[...],
                             preferred_element_type=jnp.float32).astype(codes_ref.dtype)


def _vq_train_kernel(x_ref, g_ref, wl_ref, bl_ref, cb_ref, logits_ref, codes_ref,
                     *, seg):
    """testing=False: hard gumbel-softmax forward value.

    The forward value of hard gumbel-softmax is one-hot(argmax(logits + g));
    the positive 1/tau scale never changes the argmax and the softmax only
    matters for the straight-through backward (not implemented here).
    """
    logits = (jnp.dot(x_ref[...], wl_ref[...], preferred_element_type=jnp.float32)
              + bl_ref[...])
    logits_ref[...] = logits.astype(logits_ref.dtype)
    scores = logits + g_ref[...]
    onehot = _segmented_argmax_onehot(scores, seg, first_only=False)
    codes_ref[...] = jnp.dot(onehot.astype(cb_ref.dtype), cb_ref[...],
                             preferred_element_type=jnp.float32).astype(codes_ref.dtype)


# ---------------------------------------------------------------------------
# Wrapper
# ---------------------------------------------------------------------------
def vq_layer_forward(inputs_BxLxI, w_logits_CxI, b_logits_C, codebook_ExC,
                     gumbel_temperature, testing, seed=0, tm=1024,
                     vmem_limit_bytes=None):
    """Pallas implementation of VQLayer.forward -> (logits_BxLxC, codes_BxLxE).

    `gumbel_temperature` is accepted for API parity; a positive temperature
    does not change the hard (argmax) forward value, so it is unused here.
    """
    del gumbel_temperature  # argmax is invariant to a positive 1/tau scale
    B, L, I = inputs_BxLxI.shape
    C = w_logits_CxI.shape[0]
    E = codebook_ExC.shape[0]
    M = B * L

    # Row tile: multiple of 64 (packed blocks keep >= 8 sublanes), clamped to
    # the problem and to >= 2 grid steps when M allows it so both v7x
    # TensorCores get work.  Per-step packed VMEM is ~tm*384 B, so even
    # tm=8192 fits the 16 MiB v5e scoped default; pass vmem_limit_bytes when
    # sweeping higher.
    tm = max(64, (int(tm) // 64) * 64)
    if M > 64:
        tm = min(tm, _round_up(-(-M // 2), 64))
    else:
        tm = 64
    M_pad = _round_up(M, tm)
    R = tm // PACK  # packed rows per tile

    in_dtype = inputs_BxLxI.dtype
    x = inputs_BxLxI.reshape(M, I)
    if M_pad != M:
        x = jnp.pad(x, ((0, M_pad - M), (0, 0)))
    x_pk = x.reshape(M_pad // PACK, PACK * I)  # free row-major reshape

    # Block-diagonal weights (8 copies on the diagonal): the matmuls consume
    # and produce the packed layout directly.
    eye = jnp.eye(PACK, dtype=in_dtype)
    wl_bd = jnp.kron(eye, w_logits_CxI.T.astype(in_dtype))   # (8I, 8C)
    cb_bd = jnp.kron(eye, codebook_ExC.T.astype(in_dtype))   # (8C, 8E)
    bias_pk = jnp.tile(b_logits_C.reshape(1, C).astype(jnp.float32), (1, PACK))

    grid = (M_pad // tm,)
    out_shape = (jax.ShapeDtypeStruct((M_pad // PACK, PACK * C), in_dtype),
                 jax.ShapeDtypeStruct((M_pad // PACK, PACK * E), in_dtype))
    out_specs = [pl.BlockSpec((R, PACK * C), lambda i: (i, 0)),
                 pl.BlockSpec((R, PACK * E), lambda i: (i, 0))]
    x_spec = pl.BlockSpec((R, PACK * I), lambda i: (i, 0))
    w_specs = [pl.BlockSpec((PACK * I, PACK * C), lambda i: (0, 0)),  # blockdiag Wl^T
               pl.BlockSpec((1, PACK * C), lambda i: (0, 0)),         # tiled bias
               pl.BlockSpec((PACK * C, PACK * E), lambda i: (0, 0))]  # blockdiag Cb^T

    if testing:
        kernel = functools.partial(_vq_test_kernel, seg=C)
        in_specs = [x_spec] + w_specs
        args = (x_pk, wl_bd, bias_pk, cb_bd)
    else:
        # Gumbel noise generated by XLA, already in the packed layout (same
        # bytes as i.i.d. per-(row, code) noise in row-major order).
        # TODO(synk): in-kernel pltpu.prng_* noise would remove this HBM
        # buffer but has no interpret-mode lowering, so it is generated here.
        u = jax.random.uniform(jax.random.PRNGKey(seed),
                               (M_pad // PACK, PACK * C), dtype=jnp.float32)
        gumbel = -jnp.log(-jnp.log(u + EPS) + EPS)
        kernel = functools.partial(_vq_train_kernel, seg=C)
        g_spec = pl.BlockSpec((R, PACK * C), lambda i: (i, 0))
        in_specs = [x_spec, g_spec] + w_specs
        args = (x_pk, gumbel, wl_bd, bias_pk, cb_bd)

    grid_spec = pltpu.PrefetchScalarGridSpec(
        num_scalar_prefetch=0, grid=grid,
        in_specs=in_specs, out_specs=out_specs)

    logits_pk, codes_pk = pl.pallas_call(
        kernel,
        out_shape=out_shape,
        grid_spec=grid_spec,
        compiler_params=pltpu.CompilerParams(
            dimension_semantics=("parallel",),
            vmem_limit_bytes=vmem_limit_bytes),
    )(*args)

    # TODO(synk): self.token_usg running count (report_ppx / report_usg) is
    # host-side numpy bookkeeping, not implemented here.
    # TODO(synk): forward-only; the straight-through gumbel-softmax backward
    # (which does depend on tau) is not reproduced.
    logits = logits_pk.reshape(M_pad, C)[:M].reshape(B, L, C)
    codes = codes_pk.reshape(M_pad, E)[:M].reshape(B, L, E)
    return logits, codes


def _reference_testing(inputs, wl, bl, wcb):
    """Plain-JAX reference for the testing=True path."""
    hi = lax.Precision.HIGHEST
    logits = jnp.einsum("bli,ci->blc", inputs, wl, precision=hi) + bl
    ind = jnp.argmax(logits, axis=-1)
    onehot = jax.nn.one_hot(ind, logits.shape[-1], dtype=jnp.float32)
    codes = jnp.einsum("blc,ec->ble", onehot, wcb, precision=hi)
    return logits, codes


if __name__ == "__main__":
    # Module hyper-params (small, TPU-friendly)
    B, L = 2, 8
    input_size = 32       # I
    codebook_size = 16    # C
    code_dim = 32         # E
    gumbel_temperature = 0.5

    key = jax.random.PRNGKey(0)
    k_x, k_wl, k_bl, k_cb = jax.random.split(key, 4)

    # Deterministic parameter init (mimics nn.Linear uniform(-1/sqrt(fan_in), .))
    lim_l = 1.0 / jnp.sqrt(jnp.float32(input_size))
    w_logits_CxI = jax.random.uniform(k_wl, (codebook_size, input_size),
                                      jnp.float32, -lim_l, lim_l)
    b_logits_C = jax.random.uniform(k_bl, (codebook_size,),
                                    jnp.float32, -lim_l, lim_l)
    lim_c = 1.0 / jnp.sqrt(jnp.float32(codebook_size))
    codebook_ExC = jax.random.uniform(k_cb, (code_dim, codebook_size),
                                      jnp.float32, -lim_c, lim_c)

    inputs_BxLxI = jax.random.normal(k_x, (B, L, input_size), jnp.float32)

    # --- testing=True path (argmax one-hot) ---
    logits_t, codes_t = vq_layer_forward(inputs_BxLxI, w_logits_CxI, b_logits_C,
                                         codebook_ExC, gumbel_temperature,
                                         testing=True)
    jax.block_until_ready((logits_t, codes_t))

    # --- testing=False path (hard gumbel-softmax forward) ---
    logits_g, codes_g = vq_layer_forward(inputs_BxLxI, w_logits_CxI, b_logits_C,
                                         codebook_ExC, gumbel_temperature,
                                         testing=False, seed=1234)
    jax.block_until_ready((logits_g, codes_g))

    # --- correctness checks ---
    ref_lt, ref_ct = _reference_testing(inputs_BxLxI, w_logits_CxI, b_logits_C,
                                        codebook_ExC)
    assert jnp.allclose(logits_t, ref_lt, atol=1e-4)
    assert jnp.allclose(codes_t, ref_ct, atol=1e-4)
    assert logits_t.shape == (B, L, codebook_size)
    assert codes_t.shape == (B, L, code_dim)

    # training path: returned logits are the *unperturbed* logits (the module
    # returns them before the gumbel-softmax), and every produced code must be
    # exactly one row of the codebook.
    assert jnp.allclose(logits_g, ref_lt, atol=1e-4)
    wcb_CxE = codebook_ExC.T                                        # (C, E)
    codes_flat = codes_g.reshape(-1, code_dim)                      # (M, E)
    dists = jnp.abs(codes_flat[:, None, :] - wcb_CxE[None, :, :]).max(-1)  # (M, C)
    assert jnp.all(dists.min(axis=-1) < 1e-5)
    assert logits_g.shape == (B, L, codebook_size)
    assert codes_g.shape == (B, L, code_dim)

    print("KERNEL_OK")
</pallas_src>

<mosaic_0001>
module attributes {stable_mosaic.version = 11 : i64} {
  func.func @_vq_test_kernel(%arg0: i32, %arg1: memref<8x256xf32, #tpu.memory_space<vmem>>, %arg2: memref<256x128xf32, #tpu.memory_space<vmem>>, %arg3: memref<1x128xf32, #tpu.memory_space<vmem>>, %arg4: memref<128x256xf32, #tpu.memory_space<vmem>>, %arg5: memref<8x128xf32, #tpu.memory_space<vmem>>, %arg6: memref<8x256xf32, #tpu.memory_space<vmem>>) attributes {dimension_semantics = [#tpu.dimension_semantics<parallel>], iteration_bounds = array<i64: 1>, scalar_prefetch = 0 : i64, scratch_operands = 0 : i64, tpu.core_type = #tpu.core_type<tc>, window_params = [{transform_indices = @transform_0, window_bounds = array<i64: 8, 256>}, {pipeline_mode = #tpu.pipeline_mode<synchronous>, transform_indices = @transform_1, window_bounds = array<i64: 256, 128>}, {pipeline_mode = #tpu.pipeline_mode<synchronous>, transform_indices = @transform_2, window_bounds = array<i64: 1, 128>}, {pipeline_mode = #tpu.pipeline_mode<synchronous>, transform_indices = @transform_3, window_bounds = array<i64: 128, 256>}, {transform_indices = @transform_4, window_bounds = array<i64: 8, 128>}, {transform_indices = @transform_5, window_bounds = array<i64: 8, 256>}]} {
    %c0 = arith.constant 0 : index
    %c0_0 = arith.constant 0 : index
    %0 = vector.load %arg1[%c0, %c0_0] : memref<8x256xf32, #tpu.memory_space<vmem>>, vector<8x256xf32>
    %c0_1 = arith.constant 0 : index
    %c0_2 = arith.constant 0 : index
    %1 = vector.load %arg2[%c0_1, %c0_2] : memref<256x128xf32, #tpu.memory_space<vmem>>, vector<256x128xf32>
    %cst = arith.constant dense<0.000000e+00> : vector<8x128xf32>
    %2 = tpu.matmul %0, %1, %cst {dimension_numbers = #tpu.dot_dimension_numbers<[1], [0], [0], [1], [0, 0, 1, 1], [], []>} : vector<8x256xf32>, vector<256x128xf32>, vector<8x128xf32> -> vector<8x128xf32>
    %c0_3 = arith.constant 0 : index
    %c0_4 = arith.constant 0 : index
    %3 = vector.load %arg3[%c0_3, %c0_4] : memref<1x128xf32, #tpu.memory_space<vmem>>, vector<1x128xf32>
    %4 = vector.broadcast %3 : vector<1x128xf32> to vector<8x128xf32>
    %5 = arith.addf %2, %4 : vector<8x128xf32>
    %c0_5 = arith.constant 0 : index
    %c0_6 = arith.constant 0 : index
    %6 = vector.load %arg5[%c0_5, %c0_6] : memref<8x128xf32, #tpu.memory_space<vmem>>, vector<8x128xf32>
    tpu.vector_store %arg5[%c0_5, %c0_6], %5 {strides = array<i32>} : memref<8x128xf32, #tpu.memory_space<vmem>>, vector<8x128xf32>,
    %7 = vector.extract_strided_slice %5 {offsets = [0, 0], sizes = [8, 16], strides = [1, 1]} : vector<8x128xf32> to vector<8x16xf32>
    %cst_7 = arith.constant dense<0xFF800000> : vector<8xf32>
    %8 = vector.multi_reduction <maximumf>, %7, %cst_7 [1] : vector<8x16xf32> to vector<8xf32>
    %9 = vector.shape_cast %8 : vector<8xf32> to vector<8x1xf32>
    %10 = vector.shape_cast %9 : vector<8x1xf32> to vector<8x1xf32>
    %11 = vector.broadcast %10 : vector<8x1xf32> to vector<8x16xf32>
    %12 = vector.extract_strided_slice %5 {offsets = [0, 16], sizes = [8, 16], strides = [1, 1]} : vector<8x128xf32> to vector<8x16xf32>
    %cst_8 = arith.constant dense<0xFF800000> : vector<8xf32>
    %13 = vector.multi_reduction <maximumf>, %12, %cst_8 [1] : vector<8x16xf32> to vector<8xf32>
    %14 = vector.shape_cast %13 : vector<8xf32> to vector<8x1xf32>
    %15 = vector.shape_cast %14 : vector<8x1xf32> to vector<8x1xf32>
    %16 = vector.broadcast %15 : vector<8x1xf32> to vector<8x16xf32>
    %17 = vector.extract_strided_slice %5 {offsets = [0, 32], sizes = [8, 16], strides = [1, 1]} : vector<8x128xf32> to vector<8x16xf32>
    %cst_9 = arith.constant dense<0xFF800000> : vector<8xf32>
    %18 = vector.multi_reduction <maximumf>, %17, %cst_9 [1] : vector<8x16xf32> to vector<8xf32>
    %19 = vector.shape_cast %18 : vector<8xf32> to vector<8x1xf32>
    %20 = vector.shape_cast %19 : vector<8x1xf32> to vector<8x1xf32>
    %21 = vector.broadcast %20 : vector<8x1xf32> to vector<8x16xf32>
    %22 = vector.extract_strided_slice %5 {offsets = [0, 48], sizes = [8, 16], strides = [1, 1]} : vector<8x128xf32> to vector<8x16xf32>
    %cst_10 = arith.constant dense<0xFF800000> : vector<8xf32>
    %23 = vector.multi_reduction <maximumf>, %22, %cst_10 [1] : vector<8x16xf32> to vector<8xf32>
    %24 = vector.shape_cast %23 : vector<8xf32> to vector<8x1xf32>
    %25 = vector.shape_cast %24 : vector<8x1xf32> to vector<8x1xf32>
    %26 = vector.broadcast %25 : vector<8x1xf32> to vector<8x16xf32>
    %27 = vector.extract_strided_slice %5 {offsets = [0, 64], sizes = [8, 16], strides = [1, 1]} : vector<8x128xf32> to vector<8x16xf32>
    %cst_11 = arith.constant dense<0xFF800000> : vector<8xf32>
    %28 = vector.multi_reduction <maximumf>, %27, %cst_11 [1] : vector<8x16xf32> to vector<8xf32>
    %29 = vector.shape_cast %28 : vector<8xf32> to vector<8x1xf32>
    %30 = vector.shape_cast %29 : vector<8x1xf32> to vector<8x1xf32>
    %31 = vector.broadcast %30 : vector<8x1xf32> to vector<8x16xf32>
    %32 = vector.extract_strided_slice %5 {offsets = [0, 80], sizes = [8, 16], strides = [1, 1]} : vector<8x128xf32> to vector<8x16xf32>
    %cst_12 = arith.constant dense<0xFF800000> : vector<8xf32>
    %33 = vector.multi_reduction <maximumf>, %32, %cst_12 [1] : vector<8x16xf32> to vector<8xf32>
    %34 = vector.shape_cast %33 : vector<8xf32> to vector<8x1xf32>
    %35 = vector.shape_cast %34 : vector<8x1xf32> to vector<8x1xf32>
    %36 = vector.broadcast %35 : vector<8x1xf32> to vector<8x16xf32>
    %37 = vector.extract_strided_slice %5 {offsets = [0, 96], sizes = [8, 16], strides = [1, 1]} : vector<8x128xf32> to vector<8x16xf32>
    %cst_13 = arith.constant dense<0xFF800000> : vector<8xf32>
    %38 = vector.multi_reduction <maximumf>, %37, %cst_13 [1] : vector<8x16xf32> to vector<8xf32>
    %39 = vector.shape_cast %38 : vector<8xf32> to vector<8x1xf32>
    %40 = vector.shape_cast %39 : vector<8x1xf32> to vector<8x1xf32>
    %41 = vector.broadcast %40 : vector<8x1xf32> to vector<8x16xf32>
    %42 = vector.extract_strided_slice %5 {offsets = [0, 112], sizes = [8, 16], strides = [1, 1]} : vector<8x128xf32> to vector<8x16xf32>
    %cst_14 = arith.constant dense<0xFF800000> : vector<8xf32>
    %43 = vector.multi_reduction <maximumf>, %42, %cst_14 [1] : vector<8x16xf32> to vector<8xf32>
    %44 = vector.shape_cast %43 : vector<8xf32> to vector<8x1xf32>
    %45 = vector.shape_cast %44 : vector<8x1xf32> to vector<8x1xf32>
    %46 = vector.broadcast %45 : vector<8x1xf32> to vector<8x16xf32>
    %47 = tpu.concatenate %11, %16, %21, %26, %31, %36, %41, %46 in 1 : vector<8x16xf32>, vector<8x16xf32>, vector<8x16xf32>, vector<8x16xf32>, vector<8x16xf32>, vector<8x16xf32>, vector<8x16xf32>, vector<8x16xf32> -> vector<8x128xf32>
    %48 = arith.cmpf oeq, %5, %47 : vector<8x128xf32>
    %49 = tpu.iota {dimensions = array<i32: 1>} : vector<8x128xi32>
    %c16_i32 = arith.constant 16 : i32
    %c0_i32 = arith.constant 0 : i32
    %50 = arith.cmpi eq, %c16_i32, %c0_i32 : i32
    %c1_i32 = arith.constant 1 : i32
    %51 = arith.select %50, %c1_i32, %c16_i32 : i32
    %52 = vector.broadcast %51 : i32 to vector<8x128xi32>
    %53 = arith.remsi %49, %52 : vector<8x128xi32>
    %c0_i32_15 = arith.constant 0 : i32
    %54 = vector.broadcast %c0_i32_15 : i32 to vector<8x128xi32>
    %55 = arith.cmpi ne, %53, %54 : vector<8x128xi32>
    %c0_i32_16 = arith.constant 0 : i32
    %56 = vector.broadcast %c0_i32_16 : i32 to vector<8x128xi32>
    %57 = arith.cmpi slt, %53, %56 : vector<8x128xi32>
    %c0_i32_17 = arith.constant 0 : i32
    %58 = arith.cmpi slt, %51, %c0_i32_17 : i32
    %59 = vector.broadcast %58 : i1 to vector<8x128xi1>
    %60 = vector.broadcast %59 : vector<8x128xi1> to vector<8x128xi1>
    %61 = arith.xori %57, %60 : vector<8x128xi1>
    %62 = arith.andi %61, %55 : vector<8x128xi1>
    %63 = vector.broadcast %51 : i32 to vector<8x128xi32>
    %64 = arith.addi %53, %63 : vector<8x128xi32>
    %65 = arith.select %62, %64, %53 : vector<8x128xi1>, vector<8x128xi32>
    %c16_i32_18 = arith.constant 16 : i32
    %66 = vector.broadcast %c16_i32_18 : i32 to vector<8x128xi32>
    %67 = arith.select %48, %65, %66 : vector<8x128xi1>, vector<8x128xi32>
    %68 = vector.extract_strided_slice %67 {offsets = [0, 0], sizes = [8, 16], strides = [1, 1]} : vector<8x128xi32> to vector<8x16xi32>
    %cst_19 = arith.constant dense<2147483647> : vector<8xi32>
    %69 = vector.multi_reduction <minsi>, %68, %cst_19 [1] : vector<8x16xi32> to vector<8xi32>
    %70 = vector.shape_cast %69 : vector<8xi32> to vector<8x1xi32>
    %71 = vector.shape_cast %70 : vector<8x1xi32> to vector<8x1xi32>
    %72 = vector.broadcast %71 : vector<8x1xi32> to vector<8x16xi32>
    %73 = vector.extract_strided_slice %67 {offsets = [0, 16], sizes = [8, 16], strides = [1, 1]} : vector<8x128xi32> to vector<8x16xi32>
    %cst_20 = arith.constant dense<2147483647> : vector<8xi32>
    %74 = vector.multi_reduction <minsi>, %73, %cst_20 [1] : vector<8x16xi32> to vector<8xi32>
    %75 = vector.shape_cast %74 : vector<8xi32> to vector<8x1xi32>
    %76 = vector.shape_cast %75 : vector<8x1xi32> to vector<8x1xi32>
    %77 = vector.broadcast %76 : vector<8x1xi32> to vector<8x16xi32>
    %78 = vector.extract_strided_slice %67 {offsets = [0, 32], sizes = [8, 16], strides = [1, 1]} : vector<8x128xi32> to vector<8x16xi32>
    %cst_21 = arith.constant dense<2147483647> : vector<8xi32>
    %79 = vector.multi_reduction <minsi>, %78, %cst_21 [1] : vector<8x16xi32> to vector<8xi32>
    %80 = vector.shape_cast %79 : vector<8xi32> to vector<8x1xi32>
    %81 = vector.shape_cast %80 : vector<8x1xi32> to vector<8x1xi32>
    %82 = vector.broadcast %81 : vector<8x1xi32> to vector<8x16xi32>
    %83 = vector.extract_strided_slice %67 {offsets = [0, 48], sizes = [8, 16], strides = [1, 1]} : vector<8x128xi32> to vector<8x16xi32>
    %cst_22 = arith.constant dense<2147483647> : vector<8xi32>
    %84 = vector.multi_reduction <minsi>, %83, %cst_22 [1] : vector<8x16xi32> to vector<8xi32>
    %85 = vector.shape_cast %84 : vector<8xi32> to vector<8x1xi32>
    %86 = vector.shape_cast %85 : vector<8x1xi32> to vector<8x1xi32>
    %87 = vector.broadcast %86 : vector<8x1xi32> to vector<8x16xi32>
    %88 = vector.extract_strided_slice %67 {offsets = [0, 64], sizes = [8, 16], strides = [1, 1]} : vector<8x128xi32> to vector<8x16xi32>
    %cst_23 = arith.constant dense<2147483647> : vector<8xi32>
    %89 = vector.multi_reduction <minsi>, %88, %cst_23 [1] : vector<8x16xi32> to vector<8xi32>
    %90 = vector.shape_cast %89 : vector<8xi32> to vector<8x1xi32>
    %91 = vector.shape_cast %90 : vector<8x1xi32> to vector<8x1xi32>
    %92 = vector.broadcast %91 : vector<8x1xi32> to vector<8x16xi32>
    %93 = vector.extract_strided_slice %67 {offsets = [0, 80], sizes = [8, 16], strides = [1, 1]} : vector<8x128xi32> to vector<8x16xi32>
    %cst_24 = arith.constant dense<2147483647> : vector<8xi32>
    %94 = vector.multi_reduction <minsi>, %93, %cst_24 [1] : vector<8x16xi32> to vector<8xi32>
    %95 = vector.shape_cast %94 : vector<8xi32> to vector<8x1xi32>
    %96 = vector.shape_cast %95 : vector<8x1xi32> to vector<8x1xi32>
    %97 = vector.broadcast %96 : vector<8x1xi32> to vector<8x16xi32>
    %98 = vector.extract_strided_slice %67 {offsets = [0, 96], sizes = [8, 16], strides = [1, 1]} : vector<8x128xi32> to vector<8x16xi32>
    %cst_25 = arith.constant dense<2147483647> : vector<8xi32>
    %99 = vector.multi_reduction <minsi>, %98, %cst_25 [1] : vector<8x16xi32> to vector<8xi32>
    %100 = vector.shape_cast %99 : vector<8xi32> to vector<8x1xi32>
    %101 = vector.shape_cast %100 : vector<8x1xi32> to vector<8x1xi32>
    %102 = vector.broadcast %101 : vector<8x1xi32> to vector<8x16xi32>
    %103 = vector.extract_strided_slice %67 {offsets = [0, 112], sizes = [8, 16], strides = [1, 1]} : vector<8x128xi32> to vector<8x16xi32>
    %cst_26 = arith.constant dense<2147483647> : vector<8xi32>
    %104 = vector.multi_reduction <minsi>, %103, %cst_26 [1] : vector<8x16xi32> to vector<8xi32>
    %105 = vector.shape_cast %104 : vector<8xi32> to vector<8x1xi32>
    %106 = vector.shape_cast %105 : vector<8x1xi32> to vector<8x1xi32>
    %107 = vector.broadcast %106 : vector<8x1xi32> to vector<8x16xi32>
    %108 = tpu.concatenate %72, %77, %82, %87, %92, %97, %102, %107 in 1 : vector<8x16xi32>, vector<8x16xi32>, vector<8x16xi32>, vector<8x16xi32>, vector<8x16xi32>, vector<8x16xi32>, vector<8x16xi32>, vector<8x16xi32> -> vector<8x128xi32>
    %109 = arith.cmpi eq, %65, %108 : vector<8x128xi32>
    %110 = arith.extui %109 : vector<8x128xi1> to vector<8x128xi32>
    %111 = arith.sitofp %110 : vector<8x128xi32> to vector<8x128xf32>
    %c0_27 = arith.constant 0 : index
    %c0_28 = arith.constant 0 : index
    %112 = vector.load %arg4[%c0_27, %c0_28] : memref<128x256xf32, #tpu.memory_space<vmem>>, vector<128x256xf32>
    %cst_29 = arith.constant dense<0.000000e+00> : vector<8x256xf32>
    %113 = tpu.matmul %111, %112, %cst_29 {dimension_numbers = #tpu.dot_dimension_numbers<[1], [0], [0], [1], [0, 0, 1, 1], [], []>} : vector<8x128xf32>, vector<128x256xf32>, vector<8x256xf32> -> vector<8x256xf32>
    %c0_30 = arith.constant 0 : index
    %c0_31 = arith.constant 0 : index
    %114 = vector.load %arg6[%c0_30, %c0_31] : memref<8x256xf32, #tpu.memory_space<vmem>>, vector<8x256xf32>
    tpu.vector_store %arg6[%c0_30, %c0_31], %113 {strides = array<i32>} : memref<8x256xf32, #tpu.memory_space<vmem>>, vector<8x256xf32>,
    return
  }
  func.func @transform_0(%arg0: i32) -> (i32, i32) {
    %c0_i32 = arith.constant 0 : i32
    %c0_i32_0 = arith.constant 0 : i32
    return %arg0, %c0_i32 : i32, i32
  }
  func.func @transform_1(%arg0: i32) -> (i32, i32) {
    %c0_i32 = arith.constant 0 : i32
    %c0_i32_0 = arith.constant 0 : i32
    %c0_i32_1 = arith.constant 0 : i32
    return %c0_i32, %c0_i32_0 : i32, i32
  }
  func.func @transform_2(%arg0: i32) -> (i32, i32) {
    %c0_i32 = arith.constant 0 : i32
    %c0_i32_0 = arith.constant 0 : i32
    %c0_i32_1 = arith.constant 0 : i32
    return %c0_i32, %c0_i32_0 : i32, i32
  }
  func.func @transform_3(%arg0: i32) -> (i32, i32) {
    %c0_i32 = arith.constant 0 : i32
    %c0_i32_0 = arith.constant 0 : i32
    %c0_i32_1 = arith.constant 0 : i32
    return %c0_i32, %c0_i32_0 : i32, i32
  }
  func.func @transform_4(%arg0: i32) -> (i32, i32) {
    %c0_i32 = arith.constant 0 : i32
    %c0_i32_0 = arith.constant 0 : i32
    return %arg0, %c0_i32 : i32, i32
  }
  func.func @transform_5(%arg0: i32) -> (i32, i32) {
    %c0_i32 = arith.constant 0 : i32
    %c0_i32_0 = arith.constant 0 : i32
    return %arg0, %c0_i32 : i32, i32
  }
}

</mosaic_0001>

<llo_original>
// kernel: tpu_custom_call.1
$region0: #{tpu_custom_call.1}
  #allocation0 [shape = 'u32[]', space=smem, size = 0x4, offset = 0x4, fixed_abs, tag = 'smem constant byte address 0x4 - core index']
  #allocation1 [shape = 'u32[144,128]{1,0:T(1,128)}', space=vmem, size = 0x12000, scoped, tag = 'internal scratch']
  %s0 = inlined_call_operand.hbm [shape: f32[8,256], index: 0, kind: input, shape index: {}]
  %s1 = inlined_call_operand.hbm [shape: f32[256,128], index: 1, kind: input, shape index: {}]
  %s2 = inlined_call_operand.vmem [shape: f32[1,128], index: 2, kind: input, shape index: {}]
  %s3 = inlined_call_operand.hbm [shape: f32[128,256], index: 3, kind: input, shape index: {}]
  %s4 = inlined_call_operand.hbm [shape: f32[8,128], index: 4, kind: output, shape index: {0}]
  %s5 = inlined_call_operand.hbm [shape: f32[8,256], index: 5, kind: output, shape index: {1}]
  %6 = xla_tuple %s4, %s5
  %s7 = sld [smem:[#allocation0]]
  $region46: #{tpu_custom_call.1} parent=0
    _
  %s9 = ssub.s32 1, %s7
  %s10 = scalar_select 0, %s9, %s7
  $region1: #{tpu_custom_call.1} parent=0
    #allocation2 [shape = 'u8[8192]{0}', space=vmem, size = 0x2000, scoped, tag = 'input window, operand 0, single buffered']
    #allocation3 [shape = 's32[1]{0}', space=sflag, size = 0x4, scoped, tag = 'scoped memory for tpu_custom_call.1']
    #allocation4 [shape = 's32[1]{0}', space=sflag, size = 0x4, scoped, tag = 'scoped memory for tpu_custom_call.1']
    #allocation5 [shape = 'u8[131072]{0}', space=vmem, size = 0x20000, scoped, tag = 'input window, operand 1, single buffered']
    #allocation6 [shape = 's32[1]{0}', space=sflag, size = 0x4, scoped, tag = 'scoped memory for tpu_custom_call.1']
    #allocation7 [shape = 'u8[131072]{0}', space=vmem, size = 0x20000, scoped, tag = 'input window, operand 3, single buffered']
    #allocation8 [shape = 'u8[4096]{0}', space=vmem, size = 0x1000, scoped, tag = 'output window, operand 0, single buffered']
    #allocation9 [shape = 'u8[8192]{0}', space=vmem, size = 0x2000, scoped, tag = 'output window, operand 1, single buffered']
    #allocation10 [shape = 's32[1]{0}', space=sflag, size = 0x4, scoped, tag = 'scoped memory for tpu_custom_call.1']
    %11 = vsyncpa [#allocation3], 0
    %12 = vsyncpa [#allocation6], 0
    %13 = vsyncpa [#allocation4], 0
    %14 = vsyncpa [#allocation10], 0
    // Predicated region
    $region2: #{tpu_custom_call.1} parent=1 // pred_check
      _
    $region3: #{tpu_custom_call.1} parent=1 // pred_check_branch
      %16 = sbr.rel (0) target = $region5
    $region4: #{tpu_custom_call.1} parent=1 // pred_region
      %s18 = ssub.s32 256, 256
      %19 = vsyncadd [#allocation3], %s18
      %s21 = sshll.u32 [#allocation2], 4
      %s22 = int_to_ptr.vmem [resolvable:$true] %s21
      %24 = dma.hbm_to_vmem [thread:$0]  %s0, 256, %s22, [#allocation3]
    $region5: #{tpu_custom_call.1} parent=1 // pred_fallthru
      _
    // Predicated region
    $region6: #{tpu_custom_call.1} parent=1 // pred_check
      _
    $region7: #{tpu_custom_call.1} parent=1 // pred_check_branch
      %26 = sbr.rel (0) target = $region9
    $region8: #{tpu_custom_call.1} parent=1 // pred_region
      %s28 = ssub.s32 4096, 4096
      %29 = vsyncadd [#allocation6], %s28
      %s30 = sshll.u32 [#allocation5], 4
      %s31 = int_to_ptr.vmem [resolvable:$true] %s30
      %36 = dma.hbm_to_vmem [thread:$0]  %s1, 4096, %s31, [#allocation6], 128, 128, 8
    $region9: #{tpu_custom_call.1} parent=1 // pred_fallthru
      _
    // Predicated region
    $region10: #{tpu_custom_call.1} parent=1 // pred_check
      _
    $region11: #{tpu_custom_call.1} parent=1 // pred_check_branch
      %38 = sbr.rel (0) target = $region13
    $region12: #{tpu_custom_call.1} parent=1 // pred_region
      _
    $region13: #{tpu_custom_call.1} parent=1 // pred_fallthru
      _
    // Predicated region
    $region14: #{tpu_custom_call.1} parent=1 // pred_check
      _
    $region15: #{tpu_custom_call.1} parent=1 // pred_check_branch
      %40 = sbr.rel (0) target = $region17
    $region16: #{tpu_custom_call.1} parent=1 // pred_region
      %s42 = ssub.s32 4096, 4096
      %43 = vsyncadd [#allocation6], %s42
      %s44 = sshll.u32 [#allocation7], 4
      %s45 = int_to_ptr.vmem [resolvable:$true] %s44
      %50 = dma.hbm_to_vmem [thread:$0]  %s3, 4096, %s45, [#allocation6], 256, 256, 16
    $region17: #{tpu_custom_call.1} parent=1 // pred_fallthru
      _
    // Predicated region
    $region18: #{tpu_custom_call.1} parent=1 // pred_check
      _
    $region19: #{tpu_custom_call.1} parent=1 // pred_check_branch
      %52 = sbr.rel (0) target = $region21
    $region20: #{tpu_custom_call.1} parent=1 // pred_region
      %53 = dma.done [#allocation3], 256
    $region21: #{tpu_custom_call.1} parent=1 // pred_fallthru
      _
    // Predicated region
    $region22: #{tpu_custom_call.1} parent=1 // pred_check
      _
    $region23: #{tpu_custom_call.1} parent=1 // pred_check_branch
      %55 = sbr.rel (0) target = $region25
    $region24: #{tpu_custom_call.1} parent=1 // pred_region
      %56 = dma.done [#allocation6], 4096
    $region25: #{tpu_custom_call.1} parent=1 // pred_fallthru
      _
    // Predicated region
    $region26: #{tpu_custom_call.1} parent=1 // pred_check
      _
    $region27: #{tpu_custom_call.1} parent=1 // pred_check_branch
      %58 = sbr.rel (0) target = $region29
    $region28: #{tpu_custom_call.1} parent=1 // pred_region
      %59 = dma.done [#allocation6], 4096
    $region29: #{tpu_custom_call.1} parent=1 // pred_fallthru
      _
    %v60 = vld [vmem:[#allocation2] sm:$0xff]
    %v61 = vld [vmem:[#allocation2 + $0x8] sm:$0xff]
    %v62 = vld [vmem:[#allocation5] sm:$0xff]
    %v63 = vld [vmem:[#allocation5 + $0x8] sm:$0xff]
    %v64 = vld [vmem:[#allocation5 + $0x10] sm:$0xff]
    %v65 = vld [vmem:[#allocation5 + $0x18] sm:$0xff]
    %v66 = vld [vmem:[#allocation5 + $0x20] sm:$0xff]
    %v67 = vld [vmem:[#allocation5 + $0x28] sm:$0xff]
    %v68 = vld [vmem:[#allocation5 + $0x30] sm:$0xff]
    %v69 = vld [vmem:[#allocation5 + $0x38] sm:$0xff]
    %v70 = vld [vmem:[#allocation5 + $0x40] sm:$0xff]
    %v71 = vld [vmem:[#allocation5 + $0x48] sm:$0xff]
    %v72 = vld [vmem:[#allocation5 + $0x50] sm:$0xff]
    %v73 = vld [vmem:[#allocation5 + $0x58] sm:$0xff]
    %v74 = vld [vmem:[#allocation5 + $0x60] sm:$0xff]
    %v75 = vld [vmem:[#allocation5 + $0x68] sm:$0xff]
    %v76 = vld [vmem:[#allocation5 + $0x70] sm:$0xff]
    %v77 = vld [vmem:[#allocation5 + $0x78] sm:$0xff]
    %v78 = vld [vmem:[#allocation5 + $0x80] sm:$0xff]
    %v79 = vld [vmem:[#allocation5 + $0x88] sm:$0xff]
    %v80 = vld [vmem:[#allocation5 + $0x90] sm:$0xff]
    %v81 = vld [vmem:[#allocation5 + $0x98] sm:$0xff]
    %v82 = vld [vmem:[#allocation5 + $0xa0] sm:$0xff]
    %v83 = vld [vmem:[#allocation5 + $0xa8] sm:$0xff]
    %v84 = vld [vmem:[#allocation5 + $0xb0] sm:$0xff]
    %v85 = vld [vmem:[#allocation5 + $0xb8] sm:$0xff]
    %v86 = vld [vmem:[#allocation5 + $0xc0] sm:$0xff]
    %v87 = vld [vmem:[#allocation5 + $0xc8] sm:$0xff]
    %v88 = vld [vmem:[#allocation5 + $0xd0] sm:$0xff]
    %v89 = vld [vmem:[#allocation5 + $0xd8] sm:$0xff]
    %v90 = vld [vmem:[#allocation5 + $0xe0] sm:$0xff]
    %v91 = vld [vmem:[#allocation5 + $0xe8] sm:$0xff]
    %v92 = vld [vmem:[#allocation5 + $0xf0] sm:$0xff]
    %v93 = vld [vmem:[#allocation5 + $0xf8] sm:$0xff]
    %v94 = vld [vmem:[%s2] sm:$0x1]
    %v96 = vlaneseq
    %v97 = vshrl.u32 %v96, 7
    %v98 = vsub.s32 0, %v97
    %v99 = vrot.slane %v94, %v98
    %101 = vmatprep.subr.mxu0 0.0
    %102 = vmatpush1.msra.mxu0 %v62
    %103 = vmatprep.subr.mxu0 0.0
    %104 = vmatpush1.msra.mxu0 %v63
    %105 = vmatprep.subr.mxu0 0.0
    %106 = vmatpush1.msra.mxu0 %v64
    %107 = vmatprep.subr.mxu0 0.0
    %108 = vmatpush1.msra.mxu0 %v65
    %109 = vmatprep.subr.mxu0 0.0
    %110 = vmatpush1.msra.mxu0 %v66
    %111 = vmatprep.subr.mxu0 0.0
    %112 = vmatpush1.msra.mxu0 %v67
    %113 = vmatprep.subr.mxu0 0.0
    %114 = vmatpush1.msra.mxu0 %v68
    %115 = vmatprep.subr.mxu0 0.0
    %116 = vmatpush1.msra.mxu0 %v69
    %117 = vmatprep.subr.mxu0 0.0
    %118 = vmatpush1.msra.mxu0 %v70
    %119 = vmatprep.subr.mxu0 0.0
    %120 = vmatpush1.msra.mxu0 %v71
    %121 = vmatprep.subr.mxu0 0.0
    %122 = vmatpush1.msra.mxu0 %v72
    %123 = vmatprep.subr.mxu0 0.0
    %124 = vmatpush1.msra.mxu0 %v73
    %125 = vmatprep.subr.mxu0 0.0
    %126 = vmatpush1.msra.mxu0 %v74
    %127 = vmatprep.subr.mxu0 0.0
    %128 = vmatpush1.msra.mxu0 %v75
    %129 = vmatprep.subr.mxu0 0.0
    %130 = vmatpush1.msra.mxu0 %v76
    %131 = vmatprep.subr.mxu0 0.0
    %132 = vmatpush1.msra.mxu0 %v77
    %133 = vmatprep.subr.mxu0 0.0
    %134 = vmatpush1.msra.mxu0 %v78
    %135 = vmatprep.subr.mxu0 0.0
    %136 = vmatpush1.msra.mxu0 %v79
    %137 = vmatprep.subr.mxu0 0.0
    %138 = vmatpush1.msra.mxu0 %v80
    %139 = vmatprep.subr.mxu0 0.0
    %140 = vmatpush1.msra.mxu0 %v81
    %141 = vmatprep.subr.mxu0 0.0
    %142 = vmatpush1.msra.mxu0 %v82
    %143 = vmatprep.subr.mxu0 0.0
    %144 = vmatpush1.msra.mxu0 %v83
    %145 = vmatprep.subr.mxu0 0.0
    %146 = vmatpush1.msra.mxu0 %v84
    %147 = vmatprep.subr.mxu0 0.0
    %148 = vmatpush1.msra.mxu0 %v85
    %149 = vmatprep.subr.mxu0 0.0
    %150 = vmatpush1.msra.mxu0 %v86
    %151 = vmatprep.subr.mxu0 0.0
    %152 = vmatpush1.msra.mxu0 %v87
    %153 = vmatprep.subr.mxu0 0.0
    %154 = vmatpush1.msra.mxu0 %v88
    %155 = vmatprep.subr.mxu0 0.0
    %156 = vmatpush1.msra.mxu0 %v89
    %157 = vmatprep.subr.mxu0 0.0
    %158 = vmatpush1.msra.mxu0 %v90
    %159 = vmatprep.subr.mxu0 0.0
    %160 = vmatpush1.msra.mxu0 %v91
    %161 = vmatprep.subr.mxu0 0.0
    %162 = vmatpush1.msra.mxu0 %v92
    %163 = vmatprep.subr.mxu0 0.0
    %164 = vmatpush1.msra.mxu0 %v93
    %165 = vmatprep.mubr.f32.mxu0 %v61
    %166 = vmatmul.mubr.f32.gmra.mrb[0].mxu0 %v60
    %v167 = vpop.f32.mrb[0].mxu0
    %v168 = vadd.f32 %v99, %v167
    %v169 = vpop.f32.mrb[0].mxu0
    %170 = vdwg.mxu0
    %171 = vst [vmem:[#allocation8] sm:$0xff] %v168
    %vm172 = vcmask 130048
    %v173 = vsel %vm172, %v168, -inf
    %174 = vmax.xlane.f32.xlu0 %v173
    %v175 = vpop.xlane.xlu0 %174
    %vm176 = vcmask 261248
    %v177 = vsel %vm176, %v168, -inf
    %178 = vmax.xlane.f32.xlu0 %v177
    %v179 = vpop.xlane.xlu0 %178
    %vm180 = vcmask 392448
    %v181 = vsel %vm180, %v168, -inf
    %182 = vmax.xlane.f32.xlu0 %v181
    %v183 = vpop.xlane.xlu0 %182
    %vm184 = vcmask 523648
    %v185 = vsel %vm184, %v168, -inf
    %186 = vmax.xlane.f32.xlu0 %v185
    %v187 = vpop.xlane.xlu0 %186
    %vm188 = vcmask 654848
    %v189 = vsel %vm188, %v168, -inf
    %190 = vmax.xlane.f32.xlu0 %v189
    %v191 = vpop.xlane.xlu0 %190
    %vm192 = vcmask 786048
    %v193 = vsel %vm192, %v168, -inf
    %194 = vmax.xlane.f32.xlu0 %v193
    %v195 = vpop.xlane.xlu0 %194
    %vm196 = vcmask 917248
    %v197 = vsel %vm196, %v168, -inf
    %198 = vmax.xlane.f32.xlu0 %v197
    %v199 = vpop.xlane.xlu0 %198
    %vm200 = vcmask 1048448
    %v201 = vsel %vm200, %v168, -inf
    %202 = vmax.xlane.f32.xlu0 %v201
    %v203 = vpop.xlane.xlu0 %202
    %v204 = vsel %vm172, %v175, %v179
    %vm205 = vcmask 261120
    %v206 = vsel %vm205, %v204, %v183
    %vm207 = vcmask 392192
    %v208 = vsel %vm207, %v206, %v187
    %vm209 = vcmask 523264
    %v210 = vsel %vm209, %v208, %v191
    %vm211 = vcmask 654336
    %v212 = vsel %vm211, %v210, %v195
    %vm213 = vcmask 785408
    %v214 = vsel %vm213, %v212, %v199
    %vm215 = vcmask 916480
    %v216 = vsel %vm215, %v214, %v203
    %vm217 = vcmp.eq.f32.partialorder %v168, %v216
    %v218 = vlaneseq
    %v219 = vand.u32 %v218, 127
    %vm220 = vcmp.lt.s32.totalorder %v219, 0
    %v221 = vsub.s32 0, %v219
    %v222 = vsel %vm220, %v221, %v219
    %v223 = vshrl.u32 %v222, 4
    %v224 = vand.u32 %v222, 15
    %v225 = vsub.s32 0, %v224
    %v226 = vsel %vm220, %v225, %v224
    %vm227 = vcmp.ne.s32.totalorder %v226, 0
    %vm228 = vcmp.lt.s32.totalorder %v226, 0
    %vm229 = vmand %vm228, %vm227
    %v230 = vadd.s32 %v226, 16
    %v231 = vsel %vm229, %v230, %v226
    %v232 = vsel %vm217, %v231, 16
    %v233 = vsel %vm172, %v232, 2147483647
    %v234 = vand.u32 %v233, 65535
    %v235 = vshra.s32 %v233, 16
    %v236 = vcvt.s32.f32 %v234
    %v237 = vcvt.s32.f32 %v235
    %238 = vmin.xlane.f32.xlu0 %v237
    %v239 = vpop.xlane.xlu0 %238
    %vm240 = vcmp.eq.f32.partialorder %v237, %v239
    %v241 = vsel %vm240, %v236, inf
    %242 = vmin.xlane.f32.xlu0 %v241
    %v243 = vpop.xlane.xlu0 %242
    %v244 = vcvt.f32.s32 %v243
    %v245 = vcvt.f32.s32 %v239
    %v246 = vshll.u32 %v245, 16
    %v247 = vadd.s32 %v246, %v244
    %v248 = vsel %vm176, %v232, 2147483647
    %v249 = vand.u32 %v248, 65535
    %v250 = vshra.s32 %v248, 16
    %v251 = vcvt.s32.f32 %v249
    %v252 = vcvt.s32.f32 %v250
    %253 = vmin.xlane.f32.xlu0 %v252
    %v254 = vpop.xlane.xlu0 %253
    %vm255 = vcmp.eq.f32.partialorder %v252, %v254
    %v256 = vsel %vm255, %v251, inf
    %257 = vmin.xlane.f32.xlu0 %v256
    %v258 = vpop.xlane.xlu0 %257
    %v259 = vcvt.f32.s32 %v258
    %v260 = vcvt.f32.s32 %v254
    %v261 = vshll.u32 %v260, 16
    %v262 = vadd.s32 %v261, %v259
    %v263 = vsel %vm180, %v232, 2147483647
    %v264 = vand.u32 %v263, 65535
    %v265 = vshra.s32 %v263, 16
    %v266 = vcvt.s32.f32 %v264
    %v267 = vcvt.s32.f32 %v265
    %268 = vmin.xlane.f32.xlu0 %v267
    %v269 = vpop.xlane.xlu0 %268
    %vm270 = vcmp.eq.f32.partialorder %v267, %v269
    %v271 = vsel %vm270, %v266, inf
    %272 = vmin.xlane.f32.xlu0 %v271
    %v273 = vpop.xlane.xlu0 %272
    %v274 = vcvt.f32.s32 %v273
    %v275 = vcvt.f32.s32 %v269
    %v276 = vshll.u32 %v275, 16
    %v277 = vadd.s32 %v276, %v274
    %v278 = vsel %vm184, %v232, 2147483647
    %v279 = vand.u32 %v278, 65535
    %v280 = vshra.s32 %v278, 16
    %v281 = vcvt.s32.f32 %v279
    %v282 = vcvt.s32.f32 %v280
    %283 = vmin.xlane.f32.xlu0 %v282
    %v284 = vpop.xlane.xlu0 %283
    %vm285 = vcmp.eq.f32.partialorder %v282, %v284
    %v286 = vsel %vm285, %v281, inf
    %287 = vmin.xlane.f32.xlu0 %v286
    %v288 = vpop.xlane.xlu0 %287
    %v289 = vcvt.f32.s32 %v288
    %v290 = vcvt.f32.s32 %v284
    %v291 = vshll.u32 %v290, 16
    %v292 = vadd.s32 %v291, %v289
    %v293 = vsel %vm188, %v232, 2147483647
    %v294 = vand.u32 %v293, 65535
    %v295 = vshra.s32 %v293, 16
    %v296 = vcvt.s32.f32 %v294
    %v297 = vcvt.s32.f32 %v295
    %298 = vmin.xlane.f32.xlu0 %v297
    %v299 = vpop.xlane.xlu0 %298
    %vm300 = vcmp.eq.f32.partialorder %v297, %v299
    %v301 = vsel %vm300, %v296, inf
    %302 = vmin.xlane.f32.xlu0 %v301
    %v303 = vpop.xlane.xlu0 %302
    %v304 = vcvt.f32.s32 %v303
    %v305 = vcvt.f32.s32 %v299
    %v306 = vshll.u32 %v305, 16
    %v307 = vadd.s32 %v306, %v304
    %v308 = vsel %vm192, %v232, 2147483647
    %v309 = vand.u32 %v308, 65535
    %v310 = vshra.s32 %v308, 16
    %v311 = vcvt.s32.f32 %v309
    %v312 = vcvt.s32.f32 %v310
    %313 = vmin.xlane.f32.xlu0 %v312
    %v314 = vpop.xlane.xlu0 %313
    %vm315 = vcmp.eq.f32.partialorder %v312, %v314
    %v316 = vsel %vm315, %v311, inf
    %317 = vmin.xlane.f32.xlu0 %v316
    %v318 = vpop.xlane.xlu0 %317
    %v319 = vcvt.f32.s32 %v318
    %v320 = vcvt.f32.s32 %v314
    %v321 = vshll.u32 %v320, 16
    %v322 = vadd.s32 %v321, %v319
    %v323 = vsel %vm196, %v232, 2147483647
    %v324 = vand.u32 %v323, 65535
    %v325 = vshra.s32 %v323, 16
    %v326 = vcvt.s32.f32 %v324
    %v327 = vcvt.s32.f32 %v325
    %328 = vmin.xlane.f32.xlu0 %v327
    %v329 = vpop.xlane.xlu0 %328
    %vm330 = vcmp.eq.f32.partialorder %v327, %v329
    %v331 = vsel %vm330, %v326, inf
    %332 = vmin.xlane.f32.xlu0 %v331
    %v333 = vpop.xlane.xlu0 %332
    %v334 = vcvt.f32.s32 %v333
    %v335 = vcvt.f32.s32 %v329
    %v336 = vshll.u32 %v335, 16
    %v337 = vadd.s32 %v336, %v334
    %v338 = vsel %vm200, %v232, 2147483647
    %v339 = vand.u32 %v338, 65535
    %v340 = vshra.s32 %v338, 16
    %v341 = vcvt.s32.f32 %v339
    %v342 = vcvt.s32.f32 %v340
    %343 = vmin.xlane.f32.xlu0 %v342
    %v344 = vpop.xlane.xlu0 %343
    %vm345 = vcmp.eq.f32.partialorder %v342, %v344
    %v346 = vsel %vm345, %v341, inf
    %347 = vmin.xlane.f32.xlu0 %v346
    %v348 = vpop.xlane.xlu0 %347
    %v349 = vcvt.f32.s32 %v348
    %v350 = vcvt.f32.s32 %v344
    %v351 = vshll.u32 %v350, 16
    %v352 = vadd.s32 %v351, %v349
    %v353 = vsel %vm172, %v247, %v262
    %v354 = vsel %vm205, %v353, %v277
    %v355 = vsel %vm207, %v354, %v292
    %v356 = vsel %vm209, %v355, %v307
    %v357 = vsel %vm211, %v356, %v322
    %v358 = vsel %vm213, %v357, %v337
    %v359 = vsel %vm215, %v358, %v352
    %vm360 = vcmp.eq.s32.totalorder %v231, %v359
    %v361 = vsel %vm360, 1, 0
    %v362 = vcvt.s32.f32 %v361
    %v363 = vld [vmem:[#allocation7] sm:$0xff]
    %v364 = vld [vmem:[#allocation7 + $0x8] sm:$0xff]
    %v365 = vld [vmem:[#allocation7 + $0x10] sm:$0xff]
    %v366 = vld [vmem:[#allocation7 + $0x18] sm:$0xff]
    %v367 = vld [vmem:[#allocation7 + $0x20] sm:$0xff]
    %v368 = vld [vmem:[#allocation7 + $0x28] sm:$0xff]
    %v369 = vld [vmem:[#allocation7 + $0x30] sm:$0xff]
    %v370 = vld [vmem:[#allocation7 + $0x38] sm:$0xff]
    %v371 = vld [vmem:[#allocation7 + $0x40] sm:$0xff]
    %v372 = vld [vmem:[#allocation7 + $0x48] sm:$0xff]
    %v373 = vld [vmem:[#allocation7 + $0x50] sm:$0xff]
    %v374 = vld [vmem:[#allocation7 + $0x58] sm:$0xff]
    %v375 = vld [vmem:[#allocation7 + $0x60] sm:$0xff]
    %v376 = vld [vmem:[#allocation7 + $0x68] sm:$0xff]
    %v377 = vld [vmem:[#allocation7 + $0x70] sm:$0xff]
    %v378 = vld [vmem:[#allocation7 + $0x78] sm:$0xff]
    %v379 = vld [vmem:[#allocation7 + $0x80] sm:$0xff]
    %v380 = vld [vmem:[#allocation7 + $0x88] sm:$0xff]
    %v381 = vld [vmem:[#allocation7 + $0x90] sm:$0xff]
    %v382 = vld [vmem:[#allocation7 + $0x98] sm:$0xff]
    %v383 = vld [vmem:[#allocation7 + $0xa0] sm:$0xff]
    %v384 = vld [vmem:[#allocation7 + $0xa8] sm:$0xff]
    %v385 = vld [vmem:[#allocation7 + $0xb0] sm:$0xff]
    %v386 = vld [vmem:[#allocation7 + $0xb8] sm:$0xff]
    %v387 = vld [vmem:[#allocation7 + $0xc0] sm:$0xff]
    %v388 = vld [vmem:[#allocation7 + $0xc8] sm:$0xff]
    %v389 = vld [vmem:[#allocation7 + $0xd0] sm:$0xff]
    %v390 = vld [vmem:[#allocation7 + $0xd8] sm:$0xff]
    %v391 = vld [vmem:[#allocation7 + $0xe0] sm:$0xff]
    %v392 = vld [vmem:[#allocation7 + $0xe8] sm:$0xff]
    %v393 = vld [vmem:[#allocation7 + $0xf0] sm:$0xff]
    %v394 = vld [vmem:[#allocation7 + $0xf8] sm:$0xff]
    %395 = vmatprep.subr.mxu0 %v364
    %396 = vmatpush1.msra.mxu0 %v363
    %397 = vmatprep.subr.mxu0 %v366
    %398 = vmatpush1.msra.mxu0 %v365
    %399 = vmatprep.subr.mxu0 %v368
    %400 = vmatpush1.msra.mxu0 %v367
    %401 = vmatprep.subr.mxu0 %v370
    %402 = vmatpush1.msra.mxu0 %v369
    %403 = vmatprep.subr.mxu0 %v372
    %404 = vmatpush1.msra.mxu0 %v371
    %405 = vmatprep.subr.mxu0 %v374
    %406 = vmatpush1.msra.mxu0 %v373
    %407 = vmatprep.subr.mxu0 %v376
    %408 = vmatpush1.msra.mxu0 %v375
    %409 = vmatprep.subr.mxu0 %v378
    %410 = vmatpush1.msra.mxu0 %v377
    %411 = vmatprep.subr.mxu0 %v380
    %412 = vmatpush1.msra.mxu0 %v379
    %413 = vmatprep.subr.mxu0 %v382
    %414 = vmatpush1.msra.mxu0 %v381
    %415 = vmatprep.subr.mxu0 %v384
    %416 = vmatpush1.msra.mxu0 %v383
    %417 = vmatprep.subr.mxu0 %v386
    %418 = vmatpush1.msra.mxu0 %v385
    %419 = vmatprep.subr.mxu0 %v388
    %420 = vmatpush1.msra.mxu0 %v387
    %421 = vmatprep.subr.mxu0 %v390
    %422 = vmatpush1.msra.mxu0 %v389
    %423 = vmatprep.subr.mxu0 %v392
    %424 = vmatpush1.msra.mxu0 %v391
    %425 = vmatprep.subr.mxu0 %v394
    %426 = vmatpush1.msra.mxu0 %v393
    %427 = vmatprep.subr.mxu0 0.0
    %428 = vmatpush1.msra.mxu0 0.0
    %429 = vmatprep.subr.mxu0 0.0
    %430 = vmatpush1.msra.mxu0 0.0
    %431 = vmatprep.subr.mxu0 0.0
    %432 = vmatpush1.msra.mxu0 0.0
    %433 = vmatprep.subr.mxu0 0.0
    %434 = vmatpush1.msra.mxu0 0.0
    %435 = vmatprep.subr.mxu0 0.0
    %436 = vmatpush1.msra.mxu0 0.0
    %437 = vmatprep.subr.mxu0 0.0
    %438 = vmatpush1.msra.mxu0 0.0
    %439 = vmatprep.subr.mxu0 0.0
    %440 = vmatpush1.msra.mxu0 0.0
    %441 = vmatprep.subr.mxu0 0.0
    %442 = vmatpush1.msra.mxu0 0.0
    %443 = vmatprep.subr.mxu0 0.0
    %444 = vmatpush1.msra.mxu0 0.0
    %445 = vmatprep.subr.mxu0 0.0
    %446 = vmatpush1.msra.mxu0 0.0
    %447 = vmatprep.subr.mxu0 0.0
    %448 = vmatpush1.msra.mxu0 0.0
    %449 = vmatprep.subr.mxu0 0.0
    %450 = vmatpush1.msra.mxu0 0.0
    %451 = vmatprep.subr.mxu0 0.0
    %452 = vmatpush1.msra.mxu0 0.0
    %453 = vmatprep.subr.mxu0 0.0
    %454 = vmatpush1.msra.mxu0 0.0
    %455 = vmatprep.subr.mxu0 0.0
    %456 = vmatpush1.msra.mxu0 0.0
    %457 = vmatprep.subr.mxu0 0.0
    %458 = vmatpush1.msra.mxu0 0.0
    %459 = vmatprep.mubr.f32.mxu0 0.0
    %460 = vmatmul.mubr.f32.gmra.mrb[0].mxu0 %v362
    %v461 = vpop.f32.mrb[0].mxu0
    %v462 = vadd.f32 0.0, %v461
    %v463 = vpop.f32.mrb[0].mxu0
    %v464 = vadd.f32 0.0, %v463
    %465 = vdwg.mxu0
    %466 = vst [vmem:[#allocation9] sm:$0xff] %v462
    %467 = vst [vmem:[#allocation9 + $0x8] sm:$0xff] %v464
    // Predicated region
    $region30: #{tpu_custom_call.1} parent=1 // pred_check
      _
    $region31: #{tpu_custom_call.1} parent=1 // pred_check_branch
      %469 = sbr.rel (0) target = $region33
    $region32: #{tpu_custom_call.1} parent=1 // pred_region
      %s471 = ssub.s32 128, 128
      %472 = vsyncadd [#allocation4], %s471
      %s474 = sshll.u32 [#allocation8], 4
      %s475 = int_to_ptr.vmem [resolvable:$true] %s474
      %477 = dma.vmem_to_hbm [thread:$0]  %s475, 128, %s4, [#allocation4]
    $region33: #{tpu_custom_call.1} parent=1 // pred_fallthru
      _
    // Predicated region
    $region34: #{tpu_custom_call.1} parent=1 // pred_check
      _
    $region35: #{tpu_custom_call.1} parent=1 // pred_check_branch
      %479 = sbr.rel (0) target = $region37
    $region36: #{tpu_custom_call.1} parent=1 // pred_region
      %s481 = ssub.s32 256, 256
      %482 = vsyncadd [#allocation10], %s481
      %s484 = sshll.u32 [#allocation9], 4
      %s485 = int_to_ptr.vmem [resolvable:$true] %s484
      %487 = dma.vmem_to_hbm [thread:$0]  %s485, 256, %s5, [#allocation10]
    $region37: #{tpu_custom_call.1} parent=1 // pred_fallthru
      _
    // Predicated region
    $region38: #{tpu_custom_call.1} parent=1 // pred_check
      _
    $region39: #{tpu_custom_call.1} parent=1 // pred_check_branch
      %489 = sbr.rel (0) target = $region41
    $region40: #{tpu_custom_call.1} parent=1 // pred_region
      %490 = dma.done [#allocation4], 128
    $region41: #{tpu_custom_call.1} parent=1 // pred_fallthru
      _
    // Predicated region
    $region42: #{tpu_custom_call.1} parent=1 // pred_check
      _
    $region43: #{tpu_custom_call.1} parent=1 // pred_check_branch
      %492 = sbr.rel (0) target = $region45
    $region44: #{tpu_custom_call.1} parent=1 // pred_region
      %493 = dma.done [#allocation10], 256
    $region45: #{tpu_custom_call.1} parent=1 // pred_fallthru
      _
    %494 = vsyncpa [#allocation3], 1
    %495 = vsyncpa [#allocation6], 1
    %496 = vsyncpa [#allocation4], 1
    %497 = vsyncpa [#allocation10], 1

</llo_original>
